<compile_context>
chip_gen: v5e
topology: v5e:2x2
jax: 0.10.0
libtpu: 0.0.40
codegen_flags: <defaults>
</compile_context>

<pallas_src>
import functools

import jax
import jax.numpy as jnp
from jax.experimental import pallas as pl
from jax.experimental.pallas import tpu as pltpu

TEMPERATURE = 0.05
_COS_EPS = 1e-8  # matches F.cosine_similarity default eps (applied per side)


def _round_up(x, m):
    return ((x + m - 1) // m) * m


def _simcse_kernel(q_ref, p_ref, loss_ref, q_cache, m_ref, l_ref, diag_ref, *,
                   inv_temp, b, tm, tn, n_col_tiles, mxu_dtype, has_pad):
    """One (row-tile, col-tile) step of the SimCSE cross-entropy loss."""
    i = pl.program_id(0)
    j = pl.program_id(1)
    row_start = i * tm
    col_start = j * tn

    # ---- once per query-row tile (first column step): normalize q rows in
    # f32 (VPU + EUP rsqrt), fold 1/temperature, cache in MXU dtype; init the
    # per-row accumulators ----------------------------------------------------
    @pl.when(j == 0)
    def _():
        q = q_ref[...].astype(jnp.float32)
        q_hat = q * jax.lax.rsqrt(
            jnp.maximum(jnp.sum(q * q, axis=-1, keepdims=True),
                        _COS_EPS * _COS_EPS))
        q_cache[...] = (q_hat * inv_temp).astype(mxu_dtype)
        diag_ref[...] = jnp.zeros_like(diag_ref)
        if n_col_tiles > 1:
            m_ref[...] = jnp.full_like(m_ref, -jnp.inf)
            l_ref[...] = jnp.zeros_like(l_ref)

    # ---- MXU: sim tile, contracting the hidden dim of BOTH operands (no
    # explicit transpose).  p arrives already L2-normalized. -------------------
    sim = jax.lax.dot_general(
        q_cache[...], p_ref[...],
        dimension_numbers=(((1,), (1,)), ((), ())),
        preferred_element_type=jnp.float32)                     # (tm, tn) f32

    # ---- diagonal (target) logits: only in tiles that meet the diagonal -----
    @pl.when((col_start < row_start + tm) & (col_start + tn > row_start))
    def _():
        rows = row_start + jax.lax.broadcasted_iota(jnp.int32, (tm, tn), 0)
        cols = col_start + jax.lax.broadcasted_iota(jnp.int32, (tm, tn), 1)
        diag_ref[...] += jnp.sum(jnp.where(rows == cols, sim, 0.0),
                                 axis=-1, keepdims=True)

    # ---- mask padded columns out of the logsumexp.  Only emitted when padding
    # exists; the iota/compare is a single (1, tn) lane row. -------------------
    if has_pad:
        col_valid = (col_start
                     + jax.lax.broadcasted_iota(jnp.int32, (1, tn), 1)) < b
        sim = jnp.where(col_valid, sim, -jnp.inf)

    def _finalize(lse):
        # per-row cross-entropy; padded rows are sliced out in the wrapper.
        loss_ref[...] = lse - diag_ref[...]

    if n_col_tiles == 1:
        # p is VMEM-resident: plain logsumexp over the whole row slab.
        m = jnp.max(sim, axis=-1, keepdims=True)
        l = jnp.sum(jnp.exp(sim - m), axis=-1, keepdims=True)
        _finalize(m + jnp.log(l))
    else:
        # streaming column tiles: flash-style online logsumexp.
        m_prev = m_ref[...]
        m_new = jnp.maximum(m_prev, jnp.max(sim, axis=-1, keepdims=True))
        alpha = jnp.exp(m_prev - m_new)
        l_ref[...] = alpha * l_ref[...] + jnp.sum(jnp.exp(sim - m_new),
                                                  axis=-1, keepdims=True)
        m_ref[...] = m_new

        @pl.when(j == n_col_tiles - 1)
        def _():
            _finalize(m_ref[...] + jnp.log(l_ref[...]))


def simcse_loss(query_embeddings, pos_embeddings, neg_embeddings=None, *,
                temperature=TEMPERATURE, use_bf16_matmul=False,
                block_rows=None, block_cols=None, max_resident_p_bytes=None):
    # TODO(synk): `neg_embeddings` is accepted by the PyTorch forward but never
    # used by it; it is ignored here as well.
    del neg_embeddings
    assert query_embeddings.ndim == 2
    assert query_embeddings.shape == pos_embeddings.shape
    b, d = query_embeddings.shape

    in_dtype = query_embeddings.dtype
    mxu_dtype = (jnp.bfloat16
                 if (in_dtype == jnp.bfloat16 or use_bf16_matmul)
                 else jnp.float32)
    in_item = jnp.dtype(in_dtype).itemsize
    mxu_item = jnp.dtype(mxu_dtype).itemsize

    d_pad = _round_up(d, 128)     # full 128-lane density on the MXU/VPU
    b8 = _round_up(b, 8)

    # ---- VMEM budget, per chip generation (v5e/v6e 128 MiB, v7x 64 MiB) -----
    mib = 1024 * 1024
    try:
        vmem_cap = int(pltpu.get_tpu_info().vmem_capacity_bytes)
    except Exception:
        vmem_cap = 64 * mib
    if vmem_cap < 32 * mib:
        vmem_cap = 64 * mib
    vmem_limit = max(32 * mib, vmem_cap - 16 * mib)   # keep headroom below cap
    budget = int(vmem_limit * 0.8)                    # planning margin

    resident_cap = budget // 2
    if max_resident_p_bytes is not None:
        resident_cap = min(resident_cap, int(max_resident_p_bytes))

    # ---- tile planning -------------------------------------------------------
    if block_rows is not None or block_cols is not None:
        tm = int(block_rows) if block_rows is not None else min(512, b8)
        assert tm % 8 == 0, "row tile must be a multiple of 8 sublanes"
        tn = int(block_cols) if block_cols is not None else tm
        assert tn % 8 == 0 and tm % tn == 0
        b_pad = _round_up(b8, tm)
        assert b_pad % tn == 0
    elif 2 * _round_up(b8, 256) * d_pad * mxu_item <= resident_cap:
        # resident-p path: one column tile spanning the whole (padded) batch.
        tm = min(512, b8)
        if b8 >= 16:   # keep >= 2 row tiles so v7x can shard across both cores
            tm = min(tm, _round_up((b8 + 1) // 2, 8))
        while tm > 8:
            b_pad = _round_up(b8, tm)
            need = (2 * b_pad * d_pad * mxu_item          # resident p (x2 buf)
                    + 2 * tm * d_pad * in_item            # q tile (double buf)
                    + tm * d_pad * (mxu_item + 8)         # q_cache + f32 temps
                    + 2 * tm * b_pad * 4)                 # sim + exp temps
            if need <= budget:
                break
            tm = max(8, _round_up(tm // 2, 8))
        b_pad = _round_up(b8, tm)
        tn = b_pad
    else:
        # streaming path: big TM (reuse factor for the p stream), TN for MXU.
        tn = min(256, b8)
        tm = min(1024, b8)
        while tm > tn:
            need = (2 * tm * d_pad * in_item              # q tile (double buf)
                    + tm * d_pad * (mxu_item + 8)         # q_cache + f32 temps
                    + 2 * tn * d_pad * mxu_item           # p tiles (double buf)
                    + 2 * tm * tn * 4)                    # sim + exp temps
            if need <= budget:
                break
            tm = max(tn, tm // 2)
        tm = _round_up(max(tm, tn), tn)
        b_pad = _round_up(b8, tm)

    n_row = b_pad // tm
    n_col = b_pad // tn
    has_pad = (b_pad != b)

    # ---- wrapper-side, one-time L2 normalization of p (f32 math) ------------
    # p is revisited by every query-row tile inside the kernel; normalizing it
    # once here avoids (B/TM)x redundant rsqrt/scale passes and big in-kernel
    # f32 temporaries for the resident copy.
    p32 = pos_embeddings.astype(jnp.float32)
    p_hat = p32 * jax.lax.rsqrt(
        jnp.maximum(jnp.sum(p32 * p32, axis=-1, keepdims=True),
                    _COS_EPS * _COS_EPS))
    p_n = p_hat.astype(mxu_dtype)

    q = query_embeddings
    if (b_pad, d_pad) != (b, d):
        q = jnp.pad(q, ((0, b_pad - b), (0, d_pad - d)))
        p_n = jnp.pad(p_n, ((0, b_pad - b), (0, d_pad - d)))

    if n_col == 1:
        # Constant index map -> DMA'd once, stays resident in VMEM.
        p_spec = pl.BlockSpec((b_pad, d_pad), lambda i, j: (0, 0))
    else:
        p_spec = pl.BlockSpec((tn, d_pad), lambda i, j: (j, 0))

    kernel = functools.partial(
        _simcse_kernel, inv_temp=float(1.0 / temperature), b=b, tm=tm, tn=tn,
        n_col_tiles=n_col, mxu_dtype=mxu_dtype, has_pad=has_pad)

    flops = 2 * b_pad * b_pad * d_pad + 8 * b_pad * d_pad
    bytes_accessed = (b_pad * d_pad * in_item
                      + (1 if n_col == 1 else n_row) * b_pad * d_pad * mxu_item
                      + b_pad * 4)
    cost = pl.CostEstimate(flops=flops,
                           transcendentals=b_pad * b_pad + 3 * b_pad,
                           bytes_accessed=bytes_accessed)

    per_row = pl.pallas_call(
        kernel,
        out_shape=jax.ShapeDtypeStruct((b_pad, 1), jnp.float32),
        grid_spec=pltpu.PrefetchScalarGridSpec(
            num_scalar_prefetch=0,
            grid=(n_row, n_col),
            in_specs=[
                pl.BlockSpec((tm, d_pad), lambda i, j: (i, 0)),   # raw q rows
                p_spec,                                           # normalized p
            ],
            out_specs=pl.BlockSpec((tm, 1), lambda i, j: (i, 0)),
            scratch_shapes=[
                pltpu.VMEM((tm, d_pad), mxu_dtype),   # cached normalized/scaled q
                pltpu.VMEM((tm, 1), jnp.float32),     # running max  (m)
                pltpu.VMEM((tm, 1), jnp.float32),     # running sum  (l)
                pltpu.VMEM((tm, 1), jnp.float32),     # diagonal (target) logits
            ],
        ),
        compiler_params=pltpu.CompilerParams(
            dimension_semantics=("parallel", "arbitrary"),
            vmem_limit_bytes=int(vmem_limit)),
        cost_estimate=cost,
    )(q, p_n)

    # Mean over the TRUE batch (padded rows sliced out).
    return jnp.sum(per_row[:b, 0]) / b


def _reference(q, p, temperature=TEMPERATURE):
    q = q.astype(jnp.float32)
    p = p.astype(jnp.float32)
    qn = q / jnp.maximum(jnp.linalg.norm(q, axis=-1, keepdims=True), _COS_EPS)
    pn = p / jnp.maximum(jnp.linalg.norm(p, axis=-1, keepdims=True), _COS_EPS)
    sim = (qn @ pn.T) / temperature
    n = q.shape[0]
    idx = jnp.arange(n)
    return jnp.mean(jax.nn.logsumexp(sim, axis=-1) - sim[idx, idx])


if __name__ == "__main__":
    key = jax.random.PRNGKey(0)
    kq, kp = jax.random.split(key)

    B, D = 20, 48
    query = jax.random.normal(kq, (B, D), dtype=jnp.float32)
    pos = jax.random.normal(kp, (B, D), dtype=jnp.float32)
    ref = _reference(query, pos)

    # 1) resident-p path: 2 query-row tiles, padded rows/cols, plain LSE.
    loss = simcse_loss(query, pos)
    jax.block_until_ready(loss)
    assert jnp.allclose(loss, ref, rtol=1e-4, atol=1e-4), (loss, ref)

    # 2) streaming path (forced small tiles): 3x3 grid, online logsumexp,
    #    diagonal-intersection gating and padded-column masking.
    loss2 = simcse_loss(query, pos, block_rows=8, block_cols=8)
    jax.block_until_ready(loss2)
    assert jnp.allclose(loss2, ref, rtol=1e-4, atol=1e-4), (loss2, ref)

    # 3) bf16 inputs through the bf16 MXU path.
    query_bf = query.astype(jnp.bfloat16)
    pos_bf = pos.astype(jnp.bfloat16)
    loss3 = simcse_loss(query_bf, pos_bf)
    jax.block_until_ready(loss3)
    ref3 = _reference(query_bf, pos_bf)
    assert jnp.allclose(loss3, ref3, rtol=5e-2, atol=5e-2), (loss3, ref3)

    print("KERNEL_OK")
</pallas_src>

<mosaic_0001>
module attributes {stable_mosaic.version = 11 : i64} {
  func.func @_simcse_kernel(%arg0: i32, %arg1: i32, %arg2: memref<16x128xf32, #tpu.memory_space<vmem>>, %arg3: memref<32x128xf32, #tpu.memory_space<vmem>>, %arg4: memref<16x1xf32, #tpu.memory_space<vmem>>, %arg5: memref<16x128xf32, #tpu.memory_space<vmem>>, %arg6: memref<16x1xf32, #tpu.memory_space<vmem>>, %arg7: memref<16x1xf32, #tpu.memory_space<vmem>>, %arg8: memref<16x1xf32, #tpu.memory_space<vmem>>) attributes {dimension_semantics = [#tpu.dimension_semantics<parallel>, #tpu.dimension_semantics<arbitrary>], iteration_bounds = array<i64: 2, 1>, scalar_prefetch = 0 : i64, scratch_operands = 4 : i64, tpu.core_type = #tpu.core_type<tc>, window_params = [{transform_indices = @transform_0, window_bounds = array<i64: 16, 128>}, {pipeline_mode = #tpu.pipeline_mode<synchronous>, transform_indices = @transform_1, window_bounds = array<i64: 32, 128>}, {transform_indices = @transform_2, window_bounds = array<i64: 16, 1>}]} {
    %c16_i32 = arith.constant 16 : i32
    %0 = arith.muli %arg0, %c16_i32 : i32
    %c32_i32 = arith.constant 32 : i32
    %1 = arith.muli %arg1, %c32_i32 : i32
    %c0_i32 = arith.constant 0 : i32
    %2 = arith.cmpi eq, %arg1, %c0_i32 : i32
    %3 = arith.extui %2 : i1 to i32
    %c0_i32_0 = arith.constant 0 : i32
    %4 = arith.cmpi ne, %3, %c0_i32_0 : i32
    scf.if %4 {
      %c0_14 = arith.constant 0 : index
      %c0_15 = arith.constant 0 : index
      %36 = vector.load %arg2[%c0_14, %c0_15] : memref<16x128xf32, #tpu.memory_space<vmem>>, vector<16x128xf32>
      %37 = arith.mulf %36, %36 : vector<16x128xf32>
      %cst_16 = arith.constant dense<0.000000e+00> : vector<16xf32>
      %38 = vector.multi_reduction <add>, %37, %cst_16 [1] : vector<16x128xf32> to vector<16xf32>
      %39 = vector.shape_cast %38 : vector<16xf32> to vector<16x1xf32>
      %cst_17 = arith.constant 1.000000e-16 : f32
      %40 = vector.broadcast %cst_17 : f32 to vector<16x1xf32>
      %41 = arith.maximumf %39, %40 : vector<16x1xf32>
      %42 = math.rsqrt %41 : vector<16x1xf32>
      %43 = vector.broadcast %42 : vector<16x1xf32> to vector<16x128xf32>
      %44 = arith.mulf %36, %43 : vector<16x128xf32>
      %cst_18 = arith.constant 2.000000e+01 : f32
      %45 = vector.broadcast %cst_18 : f32 to vector<16x128xf32>
      %46 = arith.mulf %44, %45 : vector<16x128xf32>
      %c0_19 = arith.constant 0 : index
      %c0_20 = arith.constant 0 : index
      %47 = vector.load %arg5[%c0_19, %c0_20] : memref<16x128xf32, #tpu.memory_space<vmem>>, vector<16x128xf32>
      tpu.vector_store %arg5[%c0_19, %c0_20], %46 {strides = array<i32>} : memref<16x128xf32, #tpu.memory_space<vmem>>, vector<16x128xf32>,
      %cst_21 = arith.constant 0.000000e+00 : f32
      %48 = vector.broadcast %cst_21 : f32 to vector<16x1xf32>
      %c0_22 = arith.constant 0 : index
      %c0_23 = arith.constant 0 : index
      %49 = vector.load %arg8[%c0_22, %c0_23] : memref<16x1xf32, #tpu.memory_space<vmem>>, vector<16x1xf32>
      tpu.vector_store %arg8[%c0_22, %c0_23], %48 {strides = array<i32>} : memref<16x1xf32, #tpu.memory_space<vmem>>, vector<16x1xf32>,
    } else {
    }
    %c0 = arith.constant 0 : index
    %c0_1 = arith.constant 0 : index
    %5 = vector.load %arg5[%c0, %c0_1] : memref<16x128xf32, #tpu.memory_space<vmem>>, vector<16x128xf32>
    %c0_2 = arith.constant 0 : index
    %c0_3 = arith.constant 0 : index
    %6 = vector.load %arg3[%c0_2, %c0_3] : memref<32x128xf32, #tpu.memory_space<vmem>>, vector<32x128xf32>
    %cst = arith.constant dense<0.000000e+00> : vector<16x32xf32>
    %7 = tpu.matmul %5, %6, %cst {dimension_numbers = #tpu.dot_dimension_numbers<[1], [1], [0], [0], [0, 0, 1, 0], [], []>} : vector<16x128xf32>, vector<32x128xf32>, vector<16x32xf32> -> vector<16x32xf32>
    %c16_i32_4 = arith.constant 16 : i32
    %8 = arith.addi %0, %c16_i32_4 : i32
    %9 = arith.cmpi slt, %1, %8 : i32
    %c32_i32_5 = arith.constant 32 : i32
    %10 = arith.addi %1, %c32_i32_5 : i32
    %11 = arith.cmpi sgt, %10, %0 : i32
    %12 = arith.andi %9, %11 : i1
    %13 = arith.extui %12 : i1 to i32
    %c0_i32_6 = arith.constant 0 : i32
    %14 = arith.cmpi ne, %13, %c0_i32_6 : i32
    scf.if %14 {
      %36 = tpu.iota {dimensions = array<i32: 0>} : vector<16x32xi32>
      %37 = vector.broadcast %0 : i32 to vector<16x32xi32>
      %38 = arith.addi %37, %36 : vector<16x32xi32>
      %39 = tpu.iota {dimensions = array<i32: 1>} : vector<16x32xi32>
      %40 = vector.broadcast %1 : i32 to vector<16x32xi32>
      %41 = arith.addi %40, %39 : vector<16x32xi32>
      %c0_14 = arith.constant 0 : index
      %c0_15 = arith.constant 0 : index
      %42 = vector.load %arg8[%c0_14, %c0_15] : memref<16x1xf32, #tpu.memory_space<vmem>>, vector<16x1xf32>
      %43 = arith.cmpi eq, %38, %41 : vector<16x32xi32>
      %cst_16 = arith.constant 0.000000e+00 : f32
      %44 = vector.broadcast %cst_16 : f32 to vector<16x32xf32>
      %45 = arith.select %43, %7, %44 : vector<16x32xi1>, vector<16x32xf32>
      %cst_17 = arith.constant dense<0.000000e+00> : vector<16xf32>
      %46 = vector.multi_reduction <add>, %45, %cst_17 [1] : vector<16x32xf32> to vector<16xf32>
      %47 = vector.shape_cast %46 : vector<16xf32> to vector<16x1xf32>
      %48 = arith.addf %42, %47 : vector<16x1xf32>
      %c0_18 = arith.constant 0 : index
      %c0_19 = arith.constant 0 : index
      %49 = vector.load %arg8[%c0_18, %c0_19] : memref<16x1xf32, #tpu.memory_space<vmem>>, vector<16x1xf32>
      tpu.vector_store %arg8[%c0_18, %c0_19], %48 {strides = array<i32>} : memref<16x1xf32, #tpu.memory_space<vmem>>, vector<16x1xf32>,
    } else {
    }
    %15 = tpu.iota {dimensions = array<i32: 1>} : vector<1x32xi32>
    %16 = vector.broadcast %1 : i32 to vector<1x32xi32>
    %17 = arith.addi %16, %15 : vector<1x32xi32>
    %c20_i32 = arith.constant 20 : i32
    %18 = vector.broadcast %c20_i32 : i32 to vector<1x32xi32>
    %19 = arith.cmpi slt, %17, %18 : vector<1x32xi32>
    %cst_7 = arith.constant 0xFF800000 : f32
    %20 = vector.shape_cast %19 : vector<1x32xi1> to vector<1x32xi1>
    %21 = vector.broadcast %20 : vector<1x32xi1> to vector<16x32xi1>
    %22 = vector.broadcast %cst_7 : f32 to vector<16x32xf32>
    %23 = arith.select %21, %7, %22 : vector<16x32xi1>, vector<16x32xf32>
    %cst_8 = arith.constant dense<0xFF800000> : vector<16xf32>
    %24 = vector.multi_reduction <maximumf>, %23, %cst_8 [1] : vector<16x32xf32> to vector<16xf32>
    %25 = vector.shape_cast %24 : vector<16xf32> to vector<16x1xf32>
    %26 = vector.broadcast %25 : vector<16x1xf32> to vector<16x32xf32>
    %27 = arith.subf %23, %26 : vector<16x32xf32>
    %28 = math.exp %27 : vector<16x32xf32>
    %cst_9 = arith.constant dense<0.000000e+00> : vector<16xf32>
    %29 = vector.multi_reduction <add>, %28, %cst_9 [1] : vector<16x32xf32> to vector<16xf32>
    %30 = vector.shape_cast %29 : vector<16xf32> to vector<16x1xf32>
    %31 = math.log %30 : vector<16x1xf32>
    %32 = arith.addf %25, %31 : vector<16x1xf32>
    %c0_10 = arith.constant 0 : index
    %c0_11 = arith.constant 0 : index
    %33 = vector.load %arg8[%c0_10, %c0_11] : memref<16x1xf32, #tpu.memory_space<vmem>>, vector<16x1xf32>
    %34 = arith.subf %32, %33 : vector<16x1xf32>
    %c0_12 = arith.constant 0 : index
    %c0_13 = arith.constant 0 : index
    %35 = vector.load %arg4[%c0_12, %c0_13] : memref<16x1xf32, #tpu.memory_space<vmem>>, vector<16x1xf32>
    tpu.vector_store %arg4[%c0_12, %c0_13], %34 {strides = array<i32>} : memref<16x1xf32, #tpu.memory_space<vmem>>, vector<16x1xf32>,
    return
  }
  func.func @transform_0(%arg0: i32, %arg1: i32) -> (i32, i32) {
    %c0_i32 = arith.constant 0 : i32
    %c0_i32_0 = arith.constant 0 : i32
    return %arg0, %c0_i32 : i32, i32
  }
  func.func @transform_1(%arg0: i32, %arg1: i32) -> (i32, i32) {
    %c0_i32 = arith.constant 0 : i32
    %c0_i32_0 = arith.constant 0 : i32
    %c0_i32_1 = arith.constant 0 : i32
    return %c0_i32, %c0_i32_0 : i32, i32
  }
  func.func @transform_2(%arg0: i32, %arg1: i32) -> (i32, i32) {
    %c0_i32 = arith.constant 0 : i32
    %c0_i32_0 = arith.constant 0 : i32
    return %arg0, %c0_i32 : i32, i32
  }
}

</mosaic_0001>

<llo_original>
// kernel: tpu_custom_call.1
$region0: #{tpu_custom_call.1}
  #allocation0 [shape = 'u32[]', space=smem, size = 0x4, offset = 0x4, fixed_abs, tag = 'smem constant byte address 0x4 - core index']
  #allocation1 [shape = 'u32[72,128]{1,0:T(1,128)}', space=vmem, size = 0x9000, scoped, tag = 'internal scratch']
  #allocation2 [shape = 'f32[16,128]{1,0:T(8,128)}', space=vmem, size = 0x2000, scoped, tag = 'scratch operand']
  #allocation3 [shape = 'f32[16,1]{1,0:T(8,128)}', space=vmem, size = 0x2000, scoped, tag = 'scratch operand']
  #allocation4 [shape = 'f32[16,1]{1,0:T(8,128)}', space=vmem, size = 0x2000, scoped, tag = 'scratch operand']
  #allocation5 [shape = 'f32[16,1]{1,0:T(8,128)}', space=vmem, size = 0x2000, scoped, tag = 'scratch operand']
  %s0 = inlined_call_operand.hbm [shape: f32[32,128], index: 0, kind: input, shape index: {}]
  %s1 = inlined_call_operand.hbm [shape: f32[32,128], index: 1, kind: input, shape index: {}]
  %s2 = inlined_call_operand.vmem [shape: f32[32,1], index: 2, kind: output, shape index: {}]
  %s3 = sld [smem:[#allocation0]]
  $region57: #{tpu_custom_call.1} parent=0
    _
  %s5 = ssub.s32 1, %s3
  %s6 = scalar_select 0, %s5, %s3
  $region1: #{tpu_custom_call.1} parent=0
    #allocation6 [shape = 'u8[16384]{0}', space=vmem, size = 0x4000, scoped, tag = 'input window, operand 0']
    #allocation7 [shape = 's32[2]{0}', space=sflag, size = 0x8, scoped, tag = 'scoped memory for tpu_custom_call.1']
    #allocation8 [shape = 'u8[16384]{0}', space=vmem, size = 0x4000, scoped, tag = 'input window, operand 1, single buffered']
    #allocation9 [shape = 's32[1]{0}', space=sflag, size = 0x4, scoped, tag = 'scoped memory for tpu_custom_call.1']
    %7 = vsyncpa [#allocation7], 0
    %s8 = scalar_lea.sflag [#allocation7], 1
    %9 = vsyncpa %s8, 0
    %10 = vsyncpa [#allocation9], 0
    loop: start=0, step=1, limit=4
    $region2: #{tpu_custom_call.1} parent=1 // loop_pre_header
      _
    $region3: #{tpu_custom_call.1} parent=1 // loop_header
      %s12 = sphi 0, %s16
      %p13 = scmp.ge.s32.totalorder %s12, 4
      %s19 = sphi 0, %s31
      %s20 = sphi 0, %s27
      %s21 = sphi 0, %s19
      %s22 = sphi 0, %s20
      %s23 = sphi 0, %s21
      %s24 = sphi 0, %s22
      %s34 = sphi 0, %s36
      %s37 = sphi 0, %s34
      %s38 = sphi 0, %s37
      %s54 = sphi 0, %s38
      %s58 = sphi 0, %s58
      %s60 = sphi 0, %s58
      %s61 = sphi 0, %s60
      %s75 = sphi 0, %s61
      %s81 = sphi 0, %s83
      %s84 = sphi 0, %s81
      %s85 = sphi 0, %s84
      %s101 = sphi 0, %s85
    $region4: #{tpu_custom_call.1} parent=1 // loop_header_branch
      %15 = sbr.rel (%p13) target = $region8
    $region5: #{tpu_custom_call.1} parent=1 // loop_body
      %s17 = ssub.s32 %s12, 1
      %s18 = ssub.s32 %s12, 2
      %s25 = sadd.s32 1, %s20
      %p26 = scmp.ge.s32.totalorder %s25, 1
      %s27 = scalar_select %p26, 0, %s25
      %s28 = sadd.s32 1, %s19
      %s29 = scalar_select %p26, %s28, %s19
      %p30 = scmp.ge.s32.totalorder %s29, 2
      %s31 = scalar_select %p30, 0, %s29
      %s32 = ssub.s32 %s19, %s31
      %p33 = scmp.eq.s32.totalorder %s32, 0
      %s35 = sadd.s32 %s34, 1
      %s36 = scalar_select %p33, %s34, %s35
      %p39 = pneg %p33
      %p40 = scmp.eq.s32.totalorder %s12, 1
      %p41 = por %p39, %p40
      %p42 = scmp.ne.s32.totalorder %s34, %s37
      %p43 = scmp.eq.s32.totalorder %s12, 0
      %p44 = por %p42, %p43
      %p45 = scmp.ne.s32.totalorder %s34, %s37
      %p46 = scmp.eq.s32.totalorder %s17, 1
      %p47 = por %p45, %p46
      %p48 = scmp.ne.s32.totalorder %s37, %s38
      %p49 = scmp.eq.s32.totalorder %s17, 0
      %p50 = por %p48, %p49
      %p51 = scmp.ne.s32.totalorder %s37, %s38
      %p52 = scmp.eq.s32.totalorder %s18, 1
      %p53 = por %p51, %p52
      %p55 = scmp.ne.s32.totalorder %s38, %s54
      %p56 = scmp.eq.s32.totalorder %s18, 0
      %p57 = por %p55, %p56
      %s59 = sadd.s32 %s58, 1
      %p62 = scmp.eq.s32.totalorder %s12, 1
      %p63 = scmp.ne.s32.totalorder %s58, %s60
      %p64 = scmp.eq.s32.totalorder %s12, 0
      %p65 = por %p63, %p64
      %p66 = scmp.ne.s32.totalorder %s58, %s60
      %p67 = scmp.eq.s32.totalorder %s17, 1
      %p68 = por %p66, %p67
      %p69 = scmp.ne.s32.totalorder %s60, %s61
      %p70 = scmp.eq.s32.totalorder %s17, 0
      %p71 = por %p69, %p70
      %p72 = scmp.ne.s32.totalorder %s60, %s61
      %p73 = scmp.eq.s32.totalorder %s18, 1
      %p74 = por %p72, %p73
      %p76 = scmp.ne.s32.totalorder %s61, %s75
      %p77 = scmp.eq.s32.totalorder %s18, 0
      %p78 = por %p76, %p77
      %s79 = ssub.s32 %s19, %s31
      %p80 = scmp.eq.s32.totalorder %s79, 0
      %s82 = sadd.s32 %s81, 1
      %s83 = scalar_select %p80, %s81, %s82
      %p86 = pneg %p80
      %p87 = scmp.eq.s32.totalorder %s12, 1
      %p88 = por %p86, %p87
      %p89 = scmp.ne.s32.totalorder %s81, %s84
      %p90 = scmp.eq.s32.totalorder %s12, 0
      %p91 = por %p89, %p90
      %p92 = scmp.ne.s32.totalorder %s81, %s84
      %p93 = scmp.eq.s32.totalorder %s17, 1
      %p94 = por %p92, %p93
      %p95 = scmp.ne.s32.totalorder %s84, %s85
      %p96 = scmp.eq.s32.totalorder %s17, 0
      %p97 = por %p95, %p96
      %p98 = scmp.ne.s32.totalorder %s84, %s85
      %p99 = scmp.eq.s32.totalorder %s18, 1
      %p100 = por %p98, %p99
      %p102 = scmp.ne.s32.totalorder %s85, %s101
      %p103 = scmp.eq.s32.totalorder %s18, 0
      %p104 = por %p102, %p103
      %p105 = scmp.le.s32.totalorder 1, %s12
      %p106 = scmp.lt.s32.totalorder %s12, 3
      %p107 = pnand %p105, %p106
      %p108 = pneg %p107
      // Predicated region
      $region9: #{tpu_custom_call.1} parent=5 // pred_check
        _
      $region10: #{tpu_custom_call.1} parent=5 // pred_check_branch
        %110 = sbr.rel (%p107) target = $region12
      $region11: #{tpu_custom_call.1} parent=5 // pred_region
        %s111 = ssub.s32 %s12, 1
        // Predicated region
        $region13: #{tpu_custom_call.1} parent=11 // pred_check
          %p112 = pneg %p71
        $region14: #{tpu_custom_call.1} parent=11 // pred_check_branch
          %114 = sbr.rel (%p112) target = $region16
        $region15: #{tpu_custom_call.1} parent=11 // pred_region
          %116 = vsyncadd [#allocation9], 0
          %s117 = sshll.u32 %s1, 4
          %s118 = int_to_ptr.hbm [resolvable:$true] %s117
          %s119 = sshll.u32 [#allocation8], 4
          %s120 = int_to_ptr.vmem [resolvable:$true] %s119
          %125 = dma.hbm_to_vmem [thread:$0]  %s118, 512, %s120, [#allocation9], 128, 128, 8
        $region16: #{tpu_custom_call.1} parent=11 // pred_fallthru
          _
      $region12: #{tpu_custom_call.1} parent=5 // pred_fallthru
        _
      %p126 = scmp.lt.s32.totalorder %s12, 2
      // Predicated region
      $region17: #{tpu_custom_call.1} parent=5 // pred_check
        %p127 = pneg %p126
      $region18: #{tpu_custom_call.1} parent=5 // pred_check_branch
        %129 = sbr.rel (%p127) target = $region20
      $region19: #{tpu_custom_call.1} parent=5 // pred_region
        // Predicated region
        $region21: #{tpu_custom_call.1} parent=19 // pred_check
          %p130 = pneg %p44
        $region22: #{tpu_custom_call.1} parent=19 // pred_check_branch
          %132 = sbr.rel (%p130) target = $region24
        $region23: #{tpu_custom_call.1} parent=19 // pred_region
          %s133 = sand.u32 %s34, 1
          %s134 = scalar_lea.sflag [#allocation7], %s133
          %s135 = sand.u32 %s34, 1
          %s136 = smul.addr %s135, 16
          %s137 = scalar_lea.vmem [#allocation6], %s136
          %s138 = smul.u32 2, %s19
          %140 = vsyncadd %s134, 0
          %s141 = smul.addr %s138, 8
          %s142 = scalar_lea.hbm %s0, %s141
          %s143 = sshll.u32 %s142, 4
          %s144 = int_to_ptr.hbm [resolvable:$true] %s143
          %s145 = sshll.u32 %s137, 4
          %s146 = int_to_ptr.vmem [resolvable:$true] %s145
          %151 = dma.hbm_to_vmem [thread:$0]  %s144, 256, %s146, %s134, 128, 128, 8
        $region24: #{tpu_custom_call.1} parent=19 // pred_fallthru
          _
      $region20: #{tpu_custom_call.1} parent=5 // pred_fallthru
        _
      %p152 = scmp.le.s32.totalorder 1, %s12
      %p153 = scmp.lt.s32.totalorder %s12, 3
      %p154 = pnand %p152, %p153
      %p155 = pneg %p154
      // Predicated region
      $region25: #{tpu_custom_call.1} parent=5 // pred_check
        _
      $region26: #{tpu_custom_call.1} parent=5 // pred_check_branch
        %157 = sbr.rel (%p154) target = $region28
      $region27: #{tpu_custom_call.1} parent=5 // pred_region
        %s158 = ssub.s32 %s12, 1
        %s159 = sand.u32 %s37, 1
        %s160 = scalar_lea.sflag [#allocation7], %s159
        %s161 = sand.u32 %s37, 1
        %s162 = smul.addr %s161, 16
        %s163 = scalar_lea.vmem [#allocation6], %s162
        // Predicated region
        $region29: #{tpu_custom_call.1} parent=27 // pred_check
          %p164 = pneg %p50
        $region30: #{tpu_custom_call.1} parent=27 // pred_check_branch
          %166 = sbr.rel (%p164) target = $region32
        $region31: #{tpu_custom_call.1} parent=27 // pred_region
          %168 = dma.done %s160, 256
        $region32: #{tpu_custom_call.1} parent=27 // pred_fallthru
          _
        // Predicated region
        $region33: #{tpu_custom_call.1} parent=27 // pred_check
          %p169 = pneg %p71
        $region34: #{tpu_custom_call.1} parent=27 // pred_check_branch
          %171 = sbr.rel (%p169) target = $region36
        $region35: #{tpu_custom_call.1} parent=27 // pred_region
          %173 = dma.done [#allocation9], 512
        $region36: #{tpu_custom_call.1} parent=27 // pred_fallthru
          _
        %s174 = sand.u32 %s37, 1
        %s175 = scalar_lea.sflag [#allocation7], %s174
        %s176 = sand.u32 %s37, 1
        %s177 = smul.addr %s176, 16
        %s178 = scalar_lea.vmem [#allocation6], %s177
        %p179 = pneg %p50
        %p180 = pneg %p47
        %p181 = pneg %p71
        %p182 = pneg %p68
        %p183 = pneg %p97
        %p184 = pneg %p94
        %s185 = smul.u32 2, %s21
        %p186 = scmp.lt.s32.totalorder %s185, 3
        %s187 = scalar_select %p186, %s185, 3
        %s188 = smul.addr %s187, 8
        %s189 = scalar_lea.vmem %s2, %s188
        %s190 = smul.u32 2, %s21
        %s191 = smul.u32 2, %s21
        %p192 = scmp.lt.s32.totalorder %s191, 3
        %s193 = scalar_select %p192, %s191, 3
        %s194 = smul.addr %s193, 8
        %s195 = scalar_lea.vmem %s2, %s194
        %s196 = smul.u32 2, %s21
        %s197 = smul.u32 %s21, 16
        %s198 = smul.u32 %s22, 32
        %p199 = scmp.eq.s32.totalorder %s22, 0
        // Predicated region
        $region37: #{tpu_custom_call.1} parent=27 // pred_check
          %p200 = pneg %p199
        $region38: #{tpu_custom_call.1} parent=27 // pred_check_branch
          %202 = sbr.rel (%p200) target = $region40
        $region39: #{tpu_custom_call.1} parent=27 // pred_region
          %v203 = vld [vmem:[%s163] sm:$0xff]
          %v204 = vld [vmem:[%s163 + $0x8] sm:$0xff]
          %v205 = vmul.f32 %v203, %v203
          %v206 = vmul.f32 %v204, %v204
          %207 = vadd.xlane.f32.xlu0 %v205
          %v208 = vpop.xlane.xlu0 %207
          %209 = vadd.xlane.f32.xlu0 %v206
          %v210 = vpop.xlane.xlu0 %209
          %v211 = vmax.f32 %v208, 1e-16
          %v212 = vmax.f32 %v210, 1e-16
          %v213 = vrsqrt.pop %v211
          %v214 = vmul.f32 %v213, %v211
          %v215 = vmul.f32 %v214, %v213
          %v216 = vmul.f32 0.5, %v215
          %v217 = vsub.f32 1.5, %v216
          %v218 = vmul.f32 %v213, %v217
          %vm219 = vweird.f32 %v211
          %vm220 = vweird.f32 %v213
          %vm221 = vmor %vm219, %vm220
          %v222 = vsel %vm221, %v213, %v218
          %v223 = vrsqrt.pop %v212
          %v224 = vmul.f32 %v223, %v212
          %v225 = vmul.f32 %v224, %v223
          %v226 = vmul.f32 0.5, %v225
          %v227 = vsub.f32 1.5, %v226
          %v228 = vmul.f32 %v223, %v227
          %vm229 = vweird.f32 %v212
          %vm230 = vweird.f32 %v223
          %vm231 = vmor %vm229, %vm230
          %v232 = vsel %vm231, %v223, %v228
          %v233 = vmul.f32 %v203, %v222
          %v234 = vmul.f32 %v204, %v232
          %v235 = vmul.f32 %v233, 20.0
          %v236 = vmul.f32 %v234, 20.0
          %237 = vst [vmem:[#allocation2] sm:$0xff] %v235
          %238 = vst [vmem:[#allocation2 + $0x8] sm:$0xff] %v236
          %vm239 = vcmask 7168
          %240 = vst.msk [vmem:[#allocation5] sm:$0xff] %vm239, 0.0
          %241 = vst.msk [vmem:[#allocation5 + $0x8] sm:$0xff] %vm239, 0.0
        $region40: #{tpu_custom_call.1} parent=27 // pred_fallthru
          _
        %v242 = vld [vmem:[#allocation2] sm:$0xff]
        %v243 = vld [vmem:[#allocation2 + $0x8] sm:$0xff]
        %v244 = vld [vmem:[#allocation8] sm:$0xff]
        %v245 = vld [vmem:[#allocation8 + $0x8] sm:$0xff]
        %v246 = vld [vmem:[#allocation8 + $0x10] sm:$0xff]
        %v247 = vld [vmem:[#allocation8 + $0x18] sm:$0xff]
        %248 = vmatpush.xpose.msra.mxu0 0.0
        %249 = vmatpush.xpose.msra.mxu0 0.0
        %250 = vmatpush.xpose.msra.mxu0 0.0
        %251 = vmatpush.xpose.msra.mxu0 0.0
        %252 = vmatpush.xpose.msra.mxu0 0.0
        %253 = vmatpush.xpose.msra.mxu0 0.0
        %254 = vmatpush.xpose.msra.mxu0 0.0
        %255 = vmatpush.xpose.msra.mxu0 0.0
        %256 = vmatpush.xpose.msra.mxu0 0.0
        %257 = vmatpush.xpose.msra.mxu0 0.0
        %258 = vmatpush.xpose.msra.mxu0 0.0
        %259 = vmatpush.xpose.msra.mxu0 0.0
        %260 = vmatpush.xpose.msra.mxu0 %v247
        %261 = vmatpush.xpose.msra.mxu0 %v246
        %262 = vmatpush.xpose.msra.mxu0 %v245
        %263 = vmatpush.xpose.msra.mxu0 %v244
        %264 = vmatmul.f32.gmra.mxu0 %v242
        %v265 = vpop.f32.mrf.mxu0
        %v266 = vadd.f32 0.0, %v265
        %267 = vmatmul.f32.gmra.mxu0 %v243
        %v268 = vpop.f32.mrf.mxu0
        %v269 = vadd.f32 0.0, %v268
        %270 = vdwg.mxu0
        %s271 = sadd.s32 %s197, 16
        %p272 = scmp.lt.s32.totalorder %s198, %s271
        %s273 = sadd.s32 %s198, 32
        %p274 = scmp.gt.s32.totalorder %s273, %s197
        %p275 = pnand %p272, %p274
        %p276 = pneg %p275
        // Predicated region
        $region41: #{tpu_custom_call.1} parent=27 // pred_check
          _
        $region42: #{tpu_custom_call.1} parent=27 // pred_check_branch
          %278 = sbr.rel (%p275) target = $region44
        $region43: #{tpu_custom_call.1} parent=27 // pred_region
          %v279 = vlaneseq
          %v280 = vshrl.u32 %v279, 7
          %v281 = vadd.s32 %v280, 8
          %v282 = vstv %s197
          %v283 = vadd.s32 %v282, %v280
          %v284 = vadd.s32 %v282, %v281
          %v285 = vlaneseq
          %v286 = vand.u32 %v285, 127
          %v287 = vstv %s198
          %v288 = vadd.s32 %v287, %v286
          %v289 = vld [vmem:[#allocation5] sm:$0xff]
          %v290 = vld [vmem:[#allocation5 + $0x8] sm:$0xff]
          %vm291 = vcmp.eq.s32.totalorder %v283, %v288
          %vm292 = vcmp.eq.s32.totalorder %v284, %v288
          %v293 = vsel %vm291, %v266, 0.0
          %v294 = vsel %vm292, %v269, 0.0
          %vm295 = vcmask 261120
          %v296 = vsel %vm295, %v293, 0.0
          %297 = vadd.xlane.f32.xlu0 %v296
          %v298 = vpop.xlane.xlu0 %297
          %v299 = vsel %vm295, %v294, 0.0
          %300 = vadd.xlane.f32.xlu0 %v299
          %v301 = vpop.xlane.xlu0 %300
          %v302 = vadd.f32 %v289, %v298
          %v303 = vadd.f32 %v290, %v301
          %vm304 = vcmask 7168
          %305 = vst.msk [vmem:[#allocation5] sm:$0xff] %vm304, %v302
          %306 = vst.msk [vmem:[#allocation5 + $0x8] sm:$0xff] %vm304, %v303
        $region44: #{tpu_custom_call.1} parent=27 // pred_fallthru
          _
        %v307 = vlaneseq
        %v308 = vand.u32 %v307, 127
        %v309 = vstv %s198
        %v310 = vadd.s32 %v309, %v308
        %vm311 = vcmp.lt.s32.totalorder %v310, 20
        %v312 = vsel %vm311, 1, 0
        %vm313 = vcmp.eq.s32.totalorder %v312, 1
        %v314 = vsel %vm313, %v266, -inf
        %v315 = vsel %vm313, %v269, -inf
        %vm316 = vcmask 261120
        %v317 = vsel %vm316, %v314, -inf
        %318 = vmax.xlane.f32.xlu0 %v317
        %v319 = vpop.xlane.xlu0 %318
        %v320 = vsel %vm316, %v315, -inf
        %321 = vmax.xlane.f32.xlu0 %v320
        %v322 = vpop.xlane.xlu0 %321
        %v323 = vsub.f32 %v314, %v319
        %v324 = vsub.f32 %v315, %v322
        %v325 = vmul.f32 %v323, 1.442695
        %v326 = vpow.pop %v325
        %v327 = vmul.f32 %v324, 1.442695
        %v328 = vpow.pop %v327
        %v329 = vsel %vm316, %v326, 0.0
        %330 = vadd.xlane.f32.xlu0 %v329
        %v331 = vpop.xlane.xlu0 %330
        %v332 = vsel %vm316, %v328, 0.0
        %333 = vadd.xlane.f32.xlu0 %v332
        %v334 = vpop.xlane.xlu0 %333
        %v335 = vlog2.pop %v331
        %v336 = vmul.f32 %v335, 0.6931472
        %v337 = vlog2.pop %v334
        %v338 = vmul.f32 %v337, 0.6931472
        %v339 = vadd.f32 %v319, %v336
        %v340 = vadd.f32 %v322, %v338
        %v341 = vld [vmem:[#allocation5] sm:$0xff]
        %v342 = vld [vmem:[#allocation5 + $0x8] sm:$0xff]
        %v343 = vsub.f32 %v339, %v341
        %v344 = vsub.f32 %v340, %v342
        %vm345 = vcmask 7168
        %346 = vst.msk [vmem:[%s195] sm:$0xff] %vm345, %v343
        %347 = vst.msk [vmem:[%s195 + $0x8] sm:$0xff] %vm345, %v344
        %s348 = smul.u32 2, %s21
        %p349 = scmp.lt.s32.totalorder %s348, 3
        %s350 = scalar_select %p349, %s348, 3
        %s351 = smul.addr %s350, 8
        %s352 = scalar_lea.vmem %s2, %s351
        // Predicated region
        $region45: #{tpu_custom_call.1} parent=27 // pred_check
          %p353 = pneg %p94
        $region46: #{tpu_custom_call.1} parent=27 // pred_check_branch
          %355 = sbr.rel (%p353) target = $region48
        $region47: #{tpu_custom_call.1} parent=27 // pred_region
          %s356 = smul.u32 2, %s21
        $region48: #{tpu_custom_call.1} parent=27 // pred_fallthru
          _
      $region28: #{tpu_custom_call.1} parent=5 // pred_fallthru
        _
      %p357 = scmp.le.s32.totalorder 2, %s12
      // Predicated region
      $region49: #{tpu_custom_call.1} parent=5 // pred_check
        %p358 = pneg %p357
      $region50: #{tpu_custom_call.1} parent=5 // pred_check_branch
        %360 = sbr.rel (%p358) target = $region52
      $region51: #{tpu_custom_call.1} parent=5 // pred_region
        %s361 = ssub.s32 %s12, 2
        // Predicated region
        $region53: #{tpu_custom_call.1} parent=51 // pred_check
          %p362 = pneg %p100
        $region54: #{tpu_custom_call.1} parent=51 // pred_check_branch
          %364 = sbr.rel (%p362) target = $region56
        $region55: #{tpu_custom_call.1} parent=51 // pred_region
          %s365 = smul.u32 2, %s23
          %p366 = scmp.lt.s32.totalorder %s365, 3
          %s367 = scalar_select %p366, %s365, 3
          %s368 = smul.addr %s367, 8
          %s369 = scalar_lea.vmem %s2, %s368
        $region56: #{tpu_custom_call.1} parent=51 // pred_fallthru
          _
      $region52: #{tpu_custom_call.1} parent=5 // pred_fallthru
        _
    $region6: #{tpu_custom_call.1} parent=1 // loop_footer
      %s16 = sadd.s32 1, %s12
    $region7: #{tpu_custom_call.1} parent=1 // loop_footer_branch
      %11 = sbr.rel target = $region3
    $region8: #{tpu_custom_call.1} parent=1 // loop_exit
      _
    %370 = vsyncpa [#allocation7], 1
    %s371 = scalar_lea.sflag [#allocation7], 1
    %372 = vsyncpa %s371, 1
    %373 = vsyncpa [#allocation9], 1

</llo_original>
